<compile_context>
chip_gen: v7x
topology: tpu7x:2x2x1
jax: 0.10.0
libtpu: 0.0.40
codegen_flags: <defaults>
</compile_context>

<pallas_src>
import math

import jax
import jax.numpy as jnp
from jax.experimental import pallas as pl
from jax.experimental.pallas import tpu as pltpu


def _round_up(x, m):
    return ((x + m - 1) // m) * m


def _embeddings_kernel(patches_ref, w_ref, add_ref, out_ref):
    # One grid step == Btile batch elements.
    #   patches_ref: [Btile, S_pad, K_pad]  (row 0 of S is the zero "cls" patch)  mm dtype
    #   w_ref:       [K_pad, H_pad]         flattened projection weight (resident) mm dtype
    #   add_ref:     [S_pad, H_pad]         pos-emb (+conv bias; cls folded into row 0), f32
    #   out_ref:     [Btile, S_pad, H_pad]
    bt, sp, kp = patches_ref.shape
    hp = w_ref.shape[1]
    # Merge (Btile, S_pad) -> M: sublane-aligned because S_pad % 16 == 0.
    p2 = patches_ref[...].reshape(bt * sp, kp)
    proj = jnp.dot(p2, w_ref[...], preferred_element_type=jnp.float32)  # one MXU pass
    proj = proj.reshape(bt, sp, hp)
    # f32 elementwise add (v5e-safe), lane-dense full-block store.
    out_ref[...] = (proj + add_ref[...]).astype(out_ref.dtype)


def embeddings_forward(x, conv_w, conv_b, cls_token, pos_emb, *, patch_size,
                       mm_dtype=jnp.bfloat16,
                       vmem_budget_bytes=24 * 1024 * 1024):
    """ViT patch + position embeddings (eval mode).

    x:         [B, C, IH, IW] (NCHW, like PyTorch)
    conv_w:    [H, C, p, p]   Conv2d weight (kernel == stride == patch)
    conv_b:    [H]            Conv2d bias
    cls_token: [1, 1, H]
    pos_emb:   [1, n_patches + 1, H]
    returns:   [B, n_patches + 1, H]
    """
    B, C, IH, IW = x.shape
    p = patch_size
    assert IH % p == 0 and IW % p == 0, "image size must be divisible by patch_size"
    gh, gw = IH // p, IW // p
    n_patches = gh * gw
    H = conv_w.shape[0]
    K = C * p * p
    S = n_patches + 1
    out_dtype = x.dtype

    mm_bytes = jnp.dtype(mm_dtype).itemsize
    out_bytes = jnp.dtype(out_dtype).itemsize

    # ---- lane/sublane friendly padded sizes --------------------------------
    K_pad = _round_up(K, 128)   # lane dim of patch load + MXU contraction dim
    H_pad = _round_up(H, 128)   # lane dim of the store
    S_pad = _round_up(S, 16)    # sublane multiple for both f32 and bf16 packing

    # ---- host-side layout plumbing (no compute) -----------------------------
    # im2col in (c, pi, pj) feature order (matches OIHW weight), patches
    # row-major over (i, j) (matches flatten(2).transpose(-1,-2)).
    patches = x.reshape(B, C, gh, p, gw, p).transpose(0, 2, 4, 1, 3, 5)
    patches = patches.reshape(B, n_patches, K).astype(mm_dtype)
    # One pad: prepend zero "cls patch" row, pad S -> S_pad and K -> K_pad.
    patches = jnp.pad(patches, ((0, 0), (1, S_pad - S), (0, K_pad - K)))

    w_flat = conv_w.reshape(H, K).T.astype(mm_dtype)                    # [K, H]
    w_flat = jnp.pad(w_flat, ((0, K_pad - K), (0, H_pad - H)))          # [K_pad, H_pad]

    # Fold conv bias + cls token into the additive term (kept f32):
    #   row 0   : 0 @ W + (pos[0] + cls)       == cls + pos[0]
    #   row n>0 : patch @ W + (pos[n] + bias)  == conv(x) + bias + pos[n]
    add = (pos_emb[0].astype(jnp.float32) + conv_b.astype(jnp.float32)[None, :])
    add = add.at[0, :].set(pos_emb[0, 0].astype(jnp.float32)
                           + cls_token[0, 0].astype(jnp.float32))
    add = jnp.pad(add, ((0, S_pad - S), (0, H_pad - H)))                # [S_pad, H_pad]

    # ---- pick Btile against an explicit VMEM budget --------------------------
    per_b = 2 * S_pad * (K_pad * mm_bytes + H_pad * out_bytes)          # dbl-buffered in+out
    resident = 2 * (K_pad * H_pad * mm_bytes + S_pad * H_pad * 4)       # weight + add
    Btile = int(max(1, min(B, (vmem_budget_bytes - resident) // max(per_b, 1))))
    B_pad = _round_up(B, Btile)
    if B_pad != B:
        patches = jnp.pad(patches, ((0, B_pad - B), (0, 0), (0, 0)))

    vmem_needed = Btile * per_b + resident
    vmem_limit = int(min(48 << 20, max(32 << 20, int(vmem_needed * 1.5))))

    cost = pl.CostEstimate(
        flops=2 * B_pad * S_pad * K_pad * H_pad,
        transcendentals=0,
        bytes_accessed=(B_pad * S_pad * K_pad * mm_bytes          # patches (read once)
                        + K_pad * H_pad * mm_bytes                # resident weight
                        + S_pad * H_pad * 4                       # resident add term
                        + B_pad * S_pad * H_pad * out_bytes),     # output
    )

    out = pl.pallas_call(
        _embeddings_kernel,
        out_shape=jax.ShapeDtypeStruct((B_pad, S_pad, H_pad), out_dtype),
        grid=(B_pad // Btile,),
        in_specs=[
            pl.BlockSpec((Btile, S_pad, K_pad), lambda b: (b, 0, 0)),  # patches per step
            pl.BlockSpec((K_pad, H_pad), lambda b: (0, 0)),            # weight (resident)
            pl.BlockSpec((S_pad, H_pad), lambda b: (0, 0)),            # pos+bias+cls (resident)
        ],
        out_specs=pl.BlockSpec((Btile, S_pad, H_pad), lambda b: (b, 0, 0)),
        compiler_params=pltpu.CompilerParams(
            dimension_semantics=("parallel",),      # batch-tile axis -> megacore on v7x
            vmem_limit_bytes=vmem_limit),
        cost_estimate=cost,
    )(patches, w_flat, add)

    return out[:B, :S, :H]


def _reference(x, conv_w, conv_b, cls_token, pos_emb, *, patch_size):
    """Pure-JAX replica of the PyTorch Embeddings.forward (eval mode)."""
    B = x.shape[0]
    H = conv_w.shape[0]
    p = patch_size
    y = jax.lax.conv_general_dilated(
        x, conv_w, window_strides=(p, p), padding="VALID",
        dimension_numbers=("NCHW", "OIHW", "NCHW"),
        precision=jax.lax.Precision.HIGHEST)
    y = y + conv_b.reshape(1, H, 1, 1)
    y = y.reshape(B, H, -1).transpose(0, 2, 1)        # flatten(2) . transpose(-1, -2)
    cls = jnp.broadcast_to(cls_token, (B, 1, H))
    return jnp.concatenate([cls, y], axis=1) + pos_emb


if __name__ == "__main__":
    # Small config: batch=2, channels=3, img=16, patch=4 -> 16 patches, hidden=32.
    B, C, IMG, P, H = 2, 3, 16, 4, 32
    n_patches = (IMG // P) * (IMG // P)

    key = jax.random.PRNGKey(0)
    kx, kw, kb, kc, kp = jax.random.split(key, 5)

    x = jax.random.normal(kx, (B, C, IMG, IMG), jnp.float32)
    lim = 1.0 / math.sqrt(C * P * P)
    conv_w = jax.random.uniform(kw, (H, C, P, P), jnp.float32, -lim, lim)
    conv_b = jax.random.uniform(kb, (H,), jnp.float32, -lim, lim)
    cls_token = 0.02 * jax.random.normal(kc, (1, 1, H), jnp.float32)
    pos_emb = 0.02 * jax.random.normal(kp, (1, n_patches + 1, H), jnp.float32)

    ref = _reference(x, conv_w, conv_b, cls_token, pos_emb, patch_size=P)

    # 1) f32 matmul path: tight tolerance (structure / layout correctness).
    out_f32 = embeddings_forward(x, conv_w, conv_b, cls_token, pos_emb,
                                 patch_size=P, mm_dtype=jnp.float32)
    out_f32 = jax.block_until_ready(out_f32)
    assert out_f32.shape == (B, n_patches + 1, H)
    assert jnp.allclose(out_f32, ref, atol=1e-3, rtol=1e-3)

    # 2) bf16 matmul path (default, perf configuration): looser tolerance.
    out_bf16 = embeddings_forward(x, conv_w, conv_b, cls_token, pos_emb,
                                  patch_size=P)
    out_bf16 = jax.block_until_ready(out_bf16)
    assert out_bf16.shape == (B, n_patches + 1, H)
    assert jnp.allclose(out_bf16, ref, atol=5e-2, rtol=5e-2)

    print("KERNEL_OK")
</pallas_src>

<mosaic_0001>
module attributes {stable_mosaic.version = 11 : i64} {
  func.func @_embeddings_kernel(%arg0: i32, %arg1: memref<2x32x128xf32, #tpu.memory_space<vmem>>, %arg2: memref<128x128xf32, #tpu.memory_space<vmem>>, %arg3: memref<32x128xf32, #tpu.memory_space<vmem>>, %arg4: memref<2x32x128xf32, #tpu.memory_space<vmem>>) attributes {dimension_semantics = [#tpu.dimension_semantics<parallel>], iteration_bounds = array<i64: 1>, scalar_prefetch = 0 : i64, scratch_operands = 0 : i64, tpu.core_type = #tpu.core_type<tc>, window_params = [{transform_indices = @transform_0, window_bounds = array<i64: 2, 32, 128>}, {pipeline_mode = #tpu.pipeline_mode<synchronous>, transform_indices = @transform_1, window_bounds = array<i64: 128, 128>}, {pipeline_mode = #tpu.pipeline_mode<synchronous>, transform_indices = @transform_2, window_bounds = array<i64: 32, 128>}, {transform_indices = @transform_3, window_bounds = array<i64: 2, 32, 128>}]} {
    %c0 = arith.constant 0 : index
    %c0_0 = arith.constant 0 : index
    %c0_1 = arith.constant 0 : index
    %0 = vector.load %arg1[%c0, %c0_0, %c0_1] : memref<2x32x128xf32, #tpu.memory_space<vmem>>, vector<2x32x128xf32>
    %1 = vector.shape_cast %0 : vector<2x32x128xf32> to vector<64x128xf32>
    %c0_2 = arith.constant 0 : index
    %c0_3 = arith.constant 0 : index
    %2 = vector.load %arg2[%c0_2, %c0_3] : memref<128x128xf32, #tpu.memory_space<vmem>>, vector<128x128xf32>
    %cst = arith.constant dense<0.000000e+00> : vector<64x128xf32>
    %3 = tpu.matmul %1, %2, %cst {dimension_numbers = #tpu.dot_dimension_numbers<[1], [0], [0], [1], [0, 0, 1, 1], [], []>} : vector<64x128xf32>, vector<128x128xf32>, vector<64x128xf32> -> vector<64x128xf32>
    %4 = vector.shape_cast %3 : vector<64x128xf32> to vector<2x32x128xf32>
    %c0_4 = arith.constant 0 : index
    %c0_5 = arith.constant 0 : index
    %5 = vector.load %arg3[%c0_4, %c0_5] : memref<32x128xf32, #tpu.memory_space<vmem>>, vector<32x128xf32>
    %6 = vector.shape_cast %5 : vector<32x128xf32> to vector<1x32x128xf32>
    %7 = vector.broadcast %6 : vector<1x32x128xf32> to vector<2x32x128xf32>
    %8 = arith.addf %4, %7 : vector<2x32x128xf32>
    %c0_6 = arith.constant 0 : index
    %c0_7 = arith.constant 0 : index
    %c0_8 = arith.constant 0 : index
    %9 = vector.load %arg4[%c0_6, %c0_7, %c0_8] : memref<2x32x128xf32, #tpu.memory_space<vmem>>, vector<2x32x128xf32>
    tpu.vector_store %arg4[%c0_6, %c0_7, %c0_8], %8 {strides = array<i32>} : memref<2x32x128xf32, #tpu.memory_space<vmem>>, vector<2x32x128xf32>,
    return
  }
  func.func @transform_0(%arg0: i32) -> (i32, i32, i32) {
    %c0_i32 = arith.constant 0 : i32
    %c0_i32_0 = arith.constant 0 : i32
    %c0_i32_1 = arith.constant 0 : i32
    return %arg0, %c0_i32, %c0_i32_0 : i32, i32, i32
  }
  func.func @transform_1(%arg0: i32) -> (i32, i32) {
    %c0_i32 = arith.constant 0 : i32
    %c0_i32_0 = arith.constant 0 : i32
    %c0_i32_1 = arith.constant 0 : i32
    return %c0_i32, %c0_i32_0 : i32, i32
  }
  func.func @transform_2(%arg0: i32) -> (i32, i32) {
    %c0_i32 = arith.constant 0 : i32
    %c0_i32_0 = arith.constant 0 : i32
    %c0_i32_1 = arith.constant 0 : i32
    return %c0_i32, %c0_i32_0 : i32, i32
  }
  func.func @transform_3(%arg0: i32) -> (i32, i32, i32) {
    %c0_i32 = arith.constant 0 : i32
    %c0_i32_0 = arith.constant 0 : i32
    %c0_i32_1 = arith.constant 0 : i32
    return %arg0, %c0_i32, %c0_i32_0 : i32, i32, i32
  }
}

</mosaic_0001>

<llo_original>
// kernel: tpu_custom_call.1
$region0: #{tpu_custom_call.1}
  #allocation0 [shape = 'u32[]', space=smem, size = 0x4, offset = 0x4, fixed_abs, tag = 'smem constant byte address 0x4 - core index']
  #allocation1 [shape = 'u32[144,128]{1,0:T(1,128)}', space=vmem, size = 0x12000, scoped, tag = 'internal scratch']
  %s0 = inlined_call_operand.hbm [shape: f32[2,32,128], index: 0, kind: input, shape index: {}]
  %s1 = inlined_call_operand.hbm [shape: f32[128,128], index: 1, kind: input, shape index: {}]
  %s2 = inlined_call_operand.hbm [shape: f32[32,128], index: 2, kind: input, shape index: {}]
  %s3 = inlined_call_operand.hbm [shape: f32[2,32,128], index: 3, kind: output, shape index: {}]
  %s4 = sld [smem:[#allocation0]]
  $region34: #{tpu_custom_call.1} parent=0
    _
  %s6 = ssub.s32 1, %s4
  %s7 = scalar_select 0, %s6, %s4
  $region1: #{tpu_custom_call.1} parent=0
    #allocation2 [shape = 'u8[32768]{0}', space=vmem, size = 0x8000, scoped, tag = 'input window, operand 0, single buffered']
    #allocation3 [shape = 's32[1]{0}', space=sflag, size = 0x4, scoped, tag = 'scoped memory for tpu_custom_call.1']
    #allocation4 [shape = 's32[1]{0}', space=sflag, size = 0x4, scoped, tag = 'scoped memory for tpu_custom_call.1']
    #allocation5 [shape = 'u8[65536]{0}', space=vmem, size = 0x10000, scoped, tag = 'input window, operand 1, single buffered']
    #allocation6 [shape = 's32[1]{0}', space=sflag, size = 0x4, scoped, tag = 'scoped memory for tpu_custom_call.1']
    #allocation7 [shape = 'u8[16384]{0}', space=vmem, size = 0x4000, scoped, tag = 'input window, operand 2, single buffered']
    #allocation8 [shape = 'u8[32768]{0}', space=vmem, size = 0x8000, scoped, tag = 'output window, operand 0, single buffered']
    %8 = vsyncpa [#allocation3], 0
    %9 = vsyncpa [#allocation6], 0
    %10 = vsyncpa [#allocation4], 0
    // Predicated region
    $region2: #{tpu_custom_call.1} parent=1 // pred_check
      _
    $region3: #{tpu_custom_call.1} parent=1 // pred_check_branch
      %12 = sbr.rel (0) target = $region5
    $region4: #{tpu_custom_call.1} parent=1 // pred_region
      %s14 = ssub.s32 1024, 1024
      %15 = vsyncadd [#allocation3], %s14
      %s16 = sshll.u32 [#allocation2], 4
      %s17 = int_to_ptr.vmem [resolvable:$true] %s16
      %22 = dma.hbm_to_vmem [thread:$0]  %s0, 1024, %s17, [#allocation3], 128, 128, 8
    $region5: #{tpu_custom_call.1} parent=1 // pred_fallthru
      _
    // Predicated region
    $region6: #{tpu_custom_call.1} parent=1 // pred_check
      _
    $region7: #{tpu_custom_call.1} parent=1 // pred_check_branch
      %24 = sbr.rel (0) target = $region9
    $region8: #{tpu_custom_call.1} parent=1 // pred_region
      %s26 = ssub.s32 2048, 2048
      %27 = vsyncadd [#allocation6], %s26
      %s28 = sshll.u32 [#allocation5], 4
      %s29 = int_to_ptr.vmem [resolvable:$true] %s28
      %34 = dma.hbm_to_vmem [thread:$0]  %s1, 2048, %s29, [#allocation6], 128, 128, 8
    $region9: #{tpu_custom_call.1} parent=1 // pred_fallthru
      _
    // Predicated region
    $region10: #{tpu_custom_call.1} parent=1 // pred_check
      _
    $region11: #{tpu_custom_call.1} parent=1 // pred_check_branch
      %36 = sbr.rel (0) target = $region13
    $region12: #{tpu_custom_call.1} parent=1 // pred_region
      %s38 = ssub.s32 512, 512
      %39 = vsyncadd [#allocation6], %s38
      %s40 = sshll.u32 [#allocation7], 4
      %s41 = int_to_ptr.vmem [resolvable:$true] %s40
      %46 = dma.hbm_to_vmem [thread:$0]  %s2, 512, %s41, [#allocation6], 128, 128, 8
    $region13: #{tpu_custom_call.1} parent=1 // pred_fallthru
      _
    // Predicated region
    $region14: #{tpu_custom_call.1} parent=1 // pred_check
      _
    $region15: #{tpu_custom_call.1} parent=1 // pred_check_branch
      %48 = sbr.rel (0) target = $region17
    $region16: #{tpu_custom_call.1} parent=1 // pred_region
      %49 = dma.done [#allocation3], 1024
    $region17: #{tpu_custom_call.1} parent=1 // pred_fallthru
      _
    // Predicated region
    $region18: #{tpu_custom_call.1} parent=1 // pred_check
      _
    $region19: #{tpu_custom_call.1} parent=1 // pred_check_branch
      %51 = sbr.rel (0) target = $region21
    $region20: #{tpu_custom_call.1} parent=1 // pred_region
      %52 = dma.done [#allocation6], 2048
    $region21: #{tpu_custom_call.1} parent=1 // pred_fallthru
      _
    // Predicated region
    $region22: #{tpu_custom_call.1} parent=1 // pred_check
      _
    $region23: #{tpu_custom_call.1} parent=1 // pred_check_branch
      %54 = sbr.rel (0) target = $region25
    $region24: #{tpu_custom_call.1} parent=1 // pred_region
      %55 = dma.done [#allocation6], 512
    $region25: #{tpu_custom_call.1} parent=1 // pred_fallthru
      _
    %v56 = vld [vmem:[#allocation2] sm:$0xff]
    %v57 = vld [vmem:[#allocation2 + $0x8] sm:$0xff]
    %v58 = vld [vmem:[#allocation2 + $0x10] sm:$0xff]
    %v59 = vld [vmem:[#allocation2 + $0x18] sm:$0xff]
    %v60 = vld [vmem:[#allocation2 + $0x20] sm:$0xff]
    %v61 = vld [vmem:[#allocation2 + $0x28] sm:$0xff]
    %v62 = vld [vmem:[#allocation2 + $0x30] sm:$0xff]
    %v63 = vld [vmem:[#allocation2 + $0x38] sm:$0xff]
    %v64 = vld [vmem:[#allocation5] sm:$0xff]
    %v65 = vld [vmem:[#allocation5 + $0x8] sm:$0xff]
    %v66 = vld [vmem:[#allocation5 + $0x10] sm:$0xff]
    %v67 = vld [vmem:[#allocation5 + $0x18] sm:$0xff]
    %v68 = vld [vmem:[#allocation5 + $0x20] sm:$0xff]
    %v69 = vld [vmem:[#allocation5 + $0x28] sm:$0xff]
    %v70 = vld [vmem:[#allocation5 + $0x30] sm:$0xff]
    %v71 = vld [vmem:[#allocation5 + $0x38] sm:$0xff]
    %v72 = vld [vmem:[#allocation5 + $0x40] sm:$0xff]
    %v73 = vld [vmem:[#allocation5 + $0x48] sm:$0xff]
    %v74 = vld [vmem:[#allocation5 + $0x50] sm:$0xff]
    %v75 = vld [vmem:[#allocation5 + $0x58] sm:$0xff]
    %v76 = vld [vmem:[#allocation5 + $0x60] sm:$0xff]
    %v77 = vld [vmem:[#allocation5 + $0x68] sm:$0xff]
    %v78 = vld [vmem:[#allocation5 + $0x70] sm:$0xff]
    %v79 = vld [vmem:[#allocation5 + $0x78] sm:$0xff]
    %80 = vmatprep.subr.mxu0 0.0
    %81 = vmatpush1.msra.mxu0 %v64
    %82 = vmatprep.subr.mxu0 0.0
    %83 = vmatpush1.msra.mxu0 %v65
    %84 = vmatprep.subr.mxu0 0.0
    %85 = vmatpush1.msra.mxu0 %v66
    %86 = vmatprep.subr.mxu0 0.0
    %87 = vmatpush1.msra.mxu0 %v67
    %88 = vmatprep.subr.mxu0 0.0
    %89 = vmatpush1.msra.mxu0 %v68
    %90 = vmatprep.subr.mxu0 0.0
    %91 = vmatpush1.msra.mxu0 %v69
    %92 = vmatprep.subr.mxu0 0.0
    %93 = vmatpush1.msra.mxu0 %v70
    %94 = vmatprep.subr.mxu0 0.0
    %95 = vmatpush1.msra.mxu0 %v71
    %96 = vmatprep.subr.mxu0 0.0
    %97 = vmatpush1.msra.mxu0 %v72
    %98 = vmatprep.subr.mxu0 0.0
    %99 = vmatpush1.msra.mxu0 %v73
    %100 = vmatprep.subr.mxu0 0.0
    %101 = vmatpush1.msra.mxu0 %v74
    %102 = vmatprep.subr.mxu0 0.0
    %103 = vmatpush1.msra.mxu0 %v75
    %104 = vmatprep.subr.mxu0 0.0
    %105 = vmatpush1.msra.mxu0 %v76
    %106 = vmatprep.subr.mxu0 0.0
    %107 = vmatpush1.msra.mxu0 %v77
    %108 = vmatprep.subr.mxu0 0.0
    %109 = vmatpush1.msra.mxu0 %v78
    %110 = vmatprep.subr.mxu0 0.0
    %111 = vmatpush1.msra.mxu0 %v79
    %112 = vmatprep.subr.mxu0 0.0
    %113 = vmatpush1.msra.mxu0 0.0
    %114 = vmatprep.subr.mxu0 0.0
    %115 = vmatpush1.msra.mxu0 0.0
    %116 = vmatprep.subr.mxu0 0.0
    %117 = vmatpush1.msra.mxu0 0.0
    %118 = vmatprep.subr.mxu0 0.0
    %119 = vmatpush1.msra.mxu0 0.0
    %120 = vmatprep.subr.mxu0 0.0
    %121 = vmatpush1.msra.mxu0 0.0
    %122 = vmatprep.subr.mxu0 0.0
    %123 = vmatpush1.msra.mxu0 0.0
    %124 = vmatprep.subr.mxu0 0.0
    %125 = vmatpush1.msra.mxu0 0.0
    %126 = vmatprep.subr.mxu0 0.0
    %127 = vmatpush1.msra.mxu0 0.0
    %128 = vmatprep.subr.mxu0 0.0
    %129 = vmatpush1.msra.mxu0 0.0
    %130 = vmatprep.subr.mxu0 0.0
    %131 = vmatpush1.msra.mxu0 0.0
    %132 = vmatprep.subr.mxu0 0.0
    %133 = vmatpush1.msra.mxu0 0.0
    %134 = vmatprep.subr.mxu0 0.0
    %135 = vmatpush1.msra.mxu0 0.0
    %136 = vmatprep.subr.mxu0 0.0
    %137 = vmatpush1.msra.mxu0 0.0
    %138 = vmatprep.subr.mxu0 0.0
    %139 = vmatpush1.msra.mxu0 0.0
    %140 = vmatprep.subr.mxu0 0.0
    %141 = vmatpush1.msra.mxu0 0.0
    %142 = vmatprep.subr.mxu0 0.0
    %143 = vmatpush1.msra.mxu0 0.0
    %144 = vmatprep.mubr.f32.mxu0 0.0
    %145 = vmatmul.mubr.f32.gmra.mrb[0].mxu0 %v56
    %v146 = vpop.f32.mrb[0].mxu0
    %v147 = vadd.f32 0.0, %v146
    %v148 = vpop.f32.mrb[0].mxu0
    %149 = vmatprep.mubr.f32.mxu0 0.0
    %150 = vmatmul.mubr.f32.gmra.mrb[0].mxu0 %v57
    %v151 = vpop.f32.mrb[0].mxu0
    %v152 = vadd.f32 0.0, %v151
    %v153 = vpop.f32.mrb[0].mxu0
    %154 = vmatprep.mubr.f32.mxu0 0.0
    %155 = vmatmul.mubr.f32.gmra.mrb[0].mxu0 %v58
    %v156 = vpop.f32.mrb[0].mxu0
    %v157 = vadd.f32 0.0, %v156
    %v158 = vpop.f32.mrb[0].mxu0
    %159 = vmatprep.mubr.f32.mxu0 0.0
    %160 = vmatmul.mubr.f32.gmra.mrb[0].mxu0 %v59
    %v161 = vpop.f32.mrb[0].mxu0
    %v162 = vadd.f32 0.0, %v161
    %v163 = vpop.f32.mrb[0].mxu0
    %164 = vmatprep.mubr.f32.mxu0 0.0
    %165 = vmatmul.mubr.f32.gmra.mrb[0].mxu0 %v60
    %v166 = vpop.f32.mrb[0].mxu0
    %v167 = vadd.f32 0.0, %v166
    %v168 = vpop.f32.mrb[0].mxu0
    %169 = vmatprep.mubr.f32.mxu0 0.0
    %170 = vmatmul.mubr.f32.gmra.mrb[0].mxu0 %v61
    %v171 = vpop.f32.mrb[0].mxu0
    %v172 = vadd.f32 0.0, %v171
    %v173 = vpop.f32.mrb[0].mxu0
    %174 = vmatprep.mubr.f32.mxu0 0.0
    %175 = vmatmul.mubr.f32.gmra.mrb[0].mxu0 %v62
    %v176 = vpop.f32.mrb[0].mxu0
    %v177 = vadd.f32 0.0, %v176
    %v178 = vpop.f32.mrb[0].mxu0
    %179 = vmatprep.mubr.f32.mxu0 0.0
    %180 = vmatmul.mubr.f32.gmra.mrb[0].mxu0 %v63
    %v181 = vpop.f32.mrb[0].mxu0
    %v182 = vadd.f32 0.0, %v181
    %v183 = vpop.f32.mrb[0].mxu0
    %184 = vdwg.mxu0
    %v185 = vld [vmem:[#allocation7] sm:$0xff]
    %v186 = vld [vmem:[#allocation7 + $0x8] sm:$0xff]
    %v187 = vld [vmem:[#allocation7 + $0x10] sm:$0xff]
    %v188 = vld [vmem:[#allocation7 + $0x18] sm:$0xff]
    %v189 = vadd.f32 %v147, %v185
    %v190 = vadd.f32 %v152, %v186
    %v191 = vadd.f32 %v157, %v187
    %v192 = vadd.f32 %v162, %v188
    %v193 = vadd.f32 %v167, %v185
    %v194 = vadd.f32 %v172, %v186
    %v195 = vadd.f32 %v177, %v187
    %v196 = vadd.f32 %v182, %v188
    %197 = vst [vmem:[#allocation8] sm:$0xff] %v189
    %198 = vst [vmem:[#allocation8 + $0x8] sm:$0xff] %v190
    %199 = vst [vmem:[#allocation8 + $0x10] sm:$0xff] %v191
    %200 = vst [vmem:[#allocation8 + $0x18] sm:$0xff] %v192
    %201 = vst [vmem:[#allocation8 + $0x20] sm:$0xff] %v193
    %202 = vst [vmem:[#allocation8 + $0x28] sm:$0xff] %v194
    %203 = vst [vmem:[#allocation8 + $0x30] sm:$0xff] %v195
    %204 = vst [vmem:[#allocation8 + $0x38] sm:$0xff] %v196
    // Predicated region
    $region26: #{tpu_custom_call.1} parent=1 // pred_check
      _
    $region27: #{tpu_custom_call.1} parent=1 // pred_check_branch
      %206 = sbr.rel (0) target = $region29
    $region28: #{tpu_custom_call.1} parent=1 // pred_region
      %s208 = ssub.s32 1024, 1024
      %209 = vsyncadd [#allocation4], %s208
      %s210 = sshll.u32 [#allocation8], 4
      %s211 = int_to_ptr.vmem [resolvable:$true] %s210
      %216 = dma.vmem_to_hbm [thread:$0]  %s211, 1024, %s3, [#allocation4], 128, 128, 8
    $region29: #{tpu_custom_call.1} parent=1 // pred_fallthru
      _
    // Predicated region
    $region30: #{tpu_custom_call.1} parent=1 // pred_check
      _
    $region31: #{tpu_custom_call.1} parent=1 // pred_check_branch
      %218 = sbr.rel (0) target = $region33
    $region32: #{tpu_custom_call.1} parent=1 // pred_region
      %219 = dma.done [#allocation4], 1024
    $region33: #{tpu_custom_call.1} parent=1 // pred_fallthru
      _
    %220 = vsyncpa [#allocation3], 1
    %221 = vsyncpa [#allocation6], 1
    %222 = vsyncpa [#allocation4], 1

</llo_original>
